<compile_context>
chip_gen: v6e
topology: v6e:2x2x1
jax: 0.10.0
libtpu: 0.0.40
codegen_flags: <defaults>
</compile_context>

<pallas_src>
import jax
import jax.numpy as jnp
from jax.experimental import pallas as pl
from jax.experimental.pallas import tpu as pltpu


# ----------------------------------------------------------------------------
# Tiled linear projection:  y = x @ w + b   (bf16 in / f32 accumulate / bf16 out)
# ----------------------------------------------------------------------------
def _linear_kernel(x_ref, w_ref, b_ref, o_ref):
    # x: (TM, K), w: (K, TN), b: (1, TN) f32  -> o: (TM, TN)
    acc = jnp.dot(x_ref[...], w_ref[...], preferred_element_type=jnp.float32)
    o_ref[...] = (acc + b_ref[...]).astype(o_ref.dtype)


def linear(x2d, w, b, out_dtype, *, tm=1024, tn=768):
    """Tiled y = x2d @ w + b with a 2-D parallel grid (pipelined, 2-TC friendly)."""
    M, K = x2d.shape
    N = w.shape[1]
    tm = min(tm, M)
    tn = min(tn, N)
    grid = (pl.cdiv(M, tm), pl.cdiv(N, tn))
    cost = pl.CostEstimate(
        flops=2 * M * K * N,
        transcendentals=0,
        bytes_accessed=int((M * K + K * N + M * N) * x2d.dtype.itemsize + N * 4),
    )
    return pl.pallas_call(
        _linear_kernel,
        out_shape=jax.ShapeDtypeStruct((M, N), out_dtype),
        grid=grid,
        in_specs=[
            pl.BlockSpec((tm, K), lambda i, j: (i, 0)),
            pl.BlockSpec((K, tn), lambda i, j: (0, j)),
            pl.BlockSpec((1, tn), lambda i, j: (0, j)),
        ],
        out_specs=pl.BlockSpec((tm, tn), lambda i, j: (i, j)),
        compiler_params=pltpu.CompilerParams(
            dimension_semantics=("parallel", "parallel"),
            vmem_limit_bytes=32 * 1024 * 1024,   # explicit (v5e default is 16 MiB)
        ),
        cost_estimate=cost,
    )(x2d, w, b.reshape(1, N).astype(jnp.float32))


# ----------------------------------------------------------------------------
# Attention core: one grid step = (batch, head-block), heads packed for 128-lane
# density; q/k/v slabs come straight out of the packed (B, T, 3C) qkv tensor.
# ----------------------------------------------------------------------------
def _make_attn_kernel(scale, hsub, head_size):
    def attn_kernel(q_ref, k_ref, v_ref, mask_ref, o_ref):
        # q/k/v refs: (1, T, bw) lane-packed head slabs; mask: (1,1,1,T) additive.
        m = mask_ref[0, 0]                                  # (1, T), broadcasts
        q_all = q_ref[0]                                    # (T, bw)
        q_all = q_all * jnp.asarray(scale, q_all.dtype)     # fold scale into q (TxD, not TxT)
        # Hoist the K relayout: ONE block-level transpose per grid step instead of
        # one XLU transpose per head (XLU is shared with softmax cross-lane sums).
        kt = k_ref[0].T                                     # (bw, T)
        v_all = v_ref[0]                                    # (T, bw)

        outs = []
        for h in range(hsub):                               # static unroll, hsub small (2 for D=64)
            sl = slice(h * head_size, (h + 1) * head_size)
            qh = q_all[:, sl]                               # (T, D) bf16
            kh_t = kt[sl, :]                                # (D, T) bf16
            s = jnp.dot(qh, kh_t, preferred_element_type=jnp.float32)   # (T, T) f32
            s = s + m                                       # additive mask
            # numerically stable softmax over keys (f32)
            s_max = jnp.max(s, axis=-1, keepdims=True)
            p = jnp.exp(s - s_max)
            denom = jnp.sum(p, axis=-1, keepdims=True)
            att = (p * pl.reciprocal(denom, approx=True)).astype(v_all.dtype)
            yh = jnp.dot(att, v_all[:, sl], preferred_element_type=jnp.float32)
            outs.append(yh.astype(o_ref.dtype))
        # single lane-dense (T, bw) store instead of hsub masked sub-128-lane stores
        o_ref[0] = jnp.concatenate(outs, axis=-1)
    return attn_kernel


def multihead_attention(qkv, mask, scale, n_heads, head_size, out_dtype):
    """qkv: packed (B, T, 3C); mask: (B, 1, 1, T) additive.  Returns (B, T, C)."""
    B, T, threeC = qkv.shape
    C = threeC // 3
    H, D = n_heads, head_size
    assert C == H * D

    # pack heads so each grid step's lane width is a multiple of 128 (lane-dense
    # AND BlockSpec-legal against the packed 3C last dim)
    hsub = 1
    while (hsub * D) % 128 != 0 and hsub < H:
        hsub += 1
    while H % hsub:                   # must also divide H (terminates at H)
        hsub += 1
    bw = hsub * D
    assert bw % 128 == 0, (
        "head packing could not reach a 128-lane multiple; "
        "unsupported (n_heads, head_size) combination")
    nhb = H // hsub

    # single flattened parallel axis: both v7x TensorCores get work even if B == 1
    grid = (B * nhb,)

    def _part_map(part):
        def index_map(i):
            return (i // nhb, 0, part * nhb + (i % nhb))
        return index_map

    qkv_block = lambda part: pl.BlockSpec((1, T, bw), _part_map(part))
    out_spec = pl.BlockSpec((1, T, bw), lambda i: (i // nhb, 0, i % nhb))
    mask_spec = pl.BlockSpec((1, 1, 1, T), lambda i: (i // nhb, 0, 0, 0))

    cost = pl.CostEstimate(
        flops=4 * B * H * T * T * D,           # QK^T + att@V
        transcendentals=B * H * T * T,         # exp
        bytes_accessed=int(4 * B * T * C * qkv.dtype.itemsize + B * T * 4),
    )
    return pl.pallas_call(
        _make_attn_kernel(scale, hsub, D),
        out_shape=jax.ShapeDtypeStruct((B, T, C), out_dtype),
        grid=grid,
        in_specs=[qkv_block(0), qkv_block(1), qkv_block(2), mask_spec],
        out_specs=out_spec,
        compiler_params=pltpu.CompilerParams(
            dimension_semantics=("parallel",),
            vmem_limit_bytes=32 * 1024 * 1024,   # explicit budget (v7x: 64 MiB physical)
        ),
        cost_estimate=cost,
    )(qkv, qkv, qkv, mask)


# ----------------------------------------------------------------------------
# BertSelfAttention forward (Pallas-backed)
# ----------------------------------------------------------------------------
def bert_self_attention(x, attention_mask, params, n_heads, head_size,
                        compute_dtype=jnp.bfloat16):
    B, T, C = x.shape
    assert C == n_heads * head_size
    cd = compute_dtype

    xc = x.astype(cd).reshape(B * T, C)
    w_attn = params["w_attn"].astype(cd)
    w_proj = params["w_proj"].astype(cd)

    # 1) fused QKV projection -> packed (B, T, 3C); NO jnp.split / HBM copies
    qkv = linear(xc, w_attn, params["b_attn"], cd).reshape(B, T, 3 * C)

    # 2) attention core: q/k/v head-slabs gathered from the packed qkv via BlockSpecs
    scale = float(head_size) ** (-0.5)
    mask = attention_mask.astype(jnp.float32)
    y = multihead_attention(qkv, mask, scale, n_heads, head_size, cd)

    # 3) output projection
    y = linear(y.reshape(B * T, C), w_proj, params["b_proj"], cd).reshape(B, T, C)

    # resid_dropout: identity in eval mode.
    return y.astype(x.dtype)


# ----------------------------------------------------------------------------
# Pure-JAX reference (for correctness check)
# ----------------------------------------------------------------------------
def bert_self_attention_ref(x, attention_mask, params, n_heads, head_size):
    B, T, C = x.shape
    qkv = x @ params["w_attn"] + params["b_attn"]
    q, k, v = jnp.split(qkv, 3, axis=2)
    q = q.reshape(B, T, n_heads, head_size).transpose(0, 2, 1, 3)
    k = k.reshape(B, T, n_heads, head_size).transpose(0, 2, 1, 3)
    v = v.reshape(B, T, n_heads, head_size).transpose(0, 2, 1, 3)
    att = (q @ jnp.swapaxes(k, -2, -1)) * (float(head_size) ** -0.5)
    att = att + attention_mask
    att = jax.nn.softmax(att, axis=-1)
    y = att @ v
    y = y.transpose(0, 2, 1, 3).reshape(B, T, C)
    return y @ params["w_proj"] + params["b_proj"]


# ----------------------------------------------------------------------------
if __name__ == "__main__":
    # small config consistent with the module (attn_head_size=64 like PICOBERT,
    # fewer heads so shapes stay small): C = n_heads * head_size = 128
    B, T = 2, 8
    n_heads, head_size = 2, 64
    C = n_heads * head_size  # 128

    key = jax.random.PRNGKey(0)
    k_x, k_wa, k_ba, k_wp, k_bp = jax.random.split(key, 5)

    x = jax.random.normal(k_x, (B, T, C), dtype=jnp.float32)

    # deterministic synthetic parameters (Linear weights stored as (in, out))
    params = {
        "w_attn": 0.02 * jax.random.normal(k_wa, (C, 3 * C), dtype=jnp.float32),
        "b_attn": 0.01 * jax.random.normal(k_ba, (3 * C,), dtype=jnp.float32),
        "w_proj": 0.02 * jax.random.normal(k_wp, (C, C), dtype=jnp.float32),
        "b_proj": 0.01 * jax.random.normal(k_bp, (C,), dtype=jnp.float32),
    }

    # additive attention mask (B, 1, 1, T): mask out last 2 tokens of batch 1
    mask = jnp.zeros((B, 1, 1, T), dtype=jnp.float32)
    mask = mask.at[1, 0, 0, -2:].set(-1e9)

    out = bert_self_attention(x, mask, params, n_heads, head_size)
    out = jax.block_until_ready(out)

    ref = bert_self_attention_ref(x, mask, params, n_heads, head_size)
    assert out.shape == (B, T, C)
    # bf16 activations/weights + EUP approx reciprocal -> relaxed tolerance
    assert jnp.allclose(out, ref, atol=2e-2, rtol=2e-2), "mismatch vs reference"

    print("KERNEL_OK")
</pallas_src>

<mosaic_0001>
module attributes {stable_mosaic.version = 11 : i64} {
  func.func @_linear_kernel(%arg0: i32, %arg1: i32, %arg2: memref<16x128xbf16, #tpu.memory_space<vmem>>, %arg3: memref<128x384xbf16, #tpu.memory_space<vmem>>, %arg4: memref<1x384xf32, #tpu.memory_space<vmem>>, %arg5: memref<16x384xbf16, #tpu.memory_space<vmem>>) attributes {dimension_semantics = [#tpu.dimension_semantics<parallel>, #tpu.dimension_semantics<parallel>], iteration_bounds = array<i64: 1, 1>, scalar_prefetch = 0 : i64, scratch_operands = 0 : i64, tpu.core_type = #tpu.core_type<tc>, window_params = [{transform_indices = @transform_0, window_bounds = array<i64: 16, 128>}, {transform_indices = @transform_1, window_bounds = array<i64: 128, 384>}, {transform_indices = @transform_2, window_bounds = array<i64: 1, 384>}, {transform_indices = @transform_3, window_bounds = array<i64: 16, 384>}]} {
    %c0 = arith.constant 0 : index
    %c0_0 = arith.constant 0 : index
    %0 = vector.load %arg2[%c0, %c0_0] : memref<16x128xbf16, #tpu.memory_space<vmem>>, vector<16x128xbf16>
    %c0_1 = arith.constant 0 : index
    %c0_2 = arith.constant 0 : index
    %1 = vector.load %arg3[%c0_1, %c0_2] : memref<128x384xbf16, #tpu.memory_space<vmem>>, vector<128x384xbf16>
    %cst = arith.constant dense<0.000000e+00> : vector<16x384xf32>
    %2 = tpu.matmul %0, %1, %cst {dimension_numbers = #tpu.dot_dimension_numbers<[1], [0], [0], [1], [0, 0, 1, 1], [], []>} : vector<16x128xbf16>, vector<128x384xbf16>, vector<16x384xf32> -> vector<16x384xf32>
    %c0_3 = arith.constant 0 : index
    %c0_4 = arith.constant 0 : index
    %3 = vector.load %arg4[%c0_3, %c0_4] : memref<1x384xf32, #tpu.memory_space<vmem>>, vector<1x384xf32>
    %4 = vector.broadcast %3 : vector<1x384xf32> to vector<16x384xf32>
    %5 = arith.addf %2, %4 : vector<16x384xf32>
    %6 = arith.truncf %5 : vector<16x384xf32> to vector<16x384xbf16>
    %c0_5 = arith.constant 0 : index
    %c0_6 = arith.constant 0 : index
    %7 = vector.load %arg5[%c0_5, %c0_6] : memref<16x384xbf16, #tpu.memory_space<vmem>>, vector<16x384xbf16>
    tpu.vector_store %arg5[%c0_5, %c0_6], %6 {strides = array<i32>} : memref<16x384xbf16, #tpu.memory_space<vmem>>, vector<16x384xbf16>,
    return
  }
  func.func @transform_0(%arg0: i32, %arg1: i32) -> (i32, i32) {
    %c0_i32 = arith.constant 0 : i32
    %c0_i32_0 = arith.constant 0 : i32
    return %arg0, %c0_i32 : i32, i32
  }
  func.func @transform_1(%arg0: i32, %arg1: i32) -> (i32, i32) {
    %c0_i32 = arith.constant 0 : i32
    %c0_i32_0 = arith.constant 0 : i32
    return %c0_i32, %arg1 : i32, i32
  }
  func.func @transform_2(%arg0: i32, %arg1: i32) -> (i32, i32) {
    %c0_i32 = arith.constant 0 : i32
    %c0_i32_0 = arith.constant 0 : i32
    return %c0_i32, %arg1 : i32, i32
  }
  func.func @transform_3(%arg0: i32, %arg1: i32) -> (i32, i32) {
    %c0_i32 = arith.constant 0 : i32
    return %arg0, %arg1 : i32, i32
  }
}

</mosaic_0001>

<llo_original>
// kernel: tpu_custom_call.1
$region0: #{tpu_custom_call.1}
  #allocation0 [shape = 'u32[]', space=smem, size = 0x4, offset = 0x4, fixed_abs, tag = 'smem constant byte address 0x4 - core index']
  #allocation1 [shape = 'u32[144,128]{1,0:T(1,128)}', space=vmem, size = 0x12000, scoped, tag = 'internal scratch']
  %s0 = inlined_call_operand.hbm [shape: bf16[16,128], index: 0, kind: input, shape index: {}]
  %s1 = inlined_call_operand.hbm [shape: bf16[128,384], index: 1, kind: input, shape index: {}]
  %s2 = inlined_call_operand.vmem [shape: f32[1,384], index: 2, kind: input, shape index: {}]
  %s3 = inlined_call_operand.hbm [shape: bf16[16,384], index: 3, kind: output, shape index: {}]
  %s4 = sld [smem:[#allocation0]]
  $region30: #{tpu_custom_call.1} parent=0
    _
  %s6 = ssub.s32 1, %s4
  %s7 = scalar_select 0, %s6, %s4
  $region1: #{tpu_custom_call.1} parent=0
    #allocation2 [shape = 'u8[4096]{0}', space=vmem, size = 0x1000, scoped, tag = 'input window, operand 0, single buffered']
    #allocation3 [shape = 's32[1]{0}', space=sflag, size = 0x4, scoped, tag = 'scoped memory for tpu_custom_call.1']
    #allocation4 [shape = 's32[1]{0}', space=sflag, size = 0x4, scoped, tag = 'scoped memory for tpu_custom_call.1']
    #allocation5 [shape = 'u8[98304]{0}', space=vmem, size = 0x18000, scoped, tag = 'input window, operand 1, single buffered']
    #allocation6 [shape = 's32[1]{0}', space=sflag, size = 0x4, scoped, tag = 'scoped memory for tpu_custom_call.1']
    #allocation7 [shape = 'u8[12288]{0}', space=vmem, size = 0x3000, scoped, tag = 'output window, operand 0, single buffered']
    %8 = vsyncpa [#allocation3], 0
    %9 = vsyncpa [#allocation6], 0
    %10 = vsyncpa [#allocation4], 0
    // Predicated region
    $region2: #{tpu_custom_call.1} parent=1 // pred_check
      _
    $region3: #{tpu_custom_call.1} parent=1 // pred_check_branch
      %12 = sbr.rel (0) target = $region5
    $region4: #{tpu_custom_call.1} parent=1 // pred_region
      %s14 = ssub.s32 128, 128
      %15 = vsyncadd [#allocation3], %s14
      %s16 = sshll.u32 [#allocation2], 4
      %s17 = int_to_ptr.vmem [resolvable:$true] %s16
      %22 = dma.hbm_to_vmem [thread:$0]  %s0, 128, %s17, [#allocation3], 64, 64, 4
    $region5: #{tpu_custom_call.1} parent=1 // pred_fallthru
      _
    // Predicated region
    $region6: #{tpu_custom_call.1} parent=1 // pred_check
      _
    $region7: #{tpu_custom_call.1} parent=1 // pred_check_branch
      %24 = sbr.rel (0) target = $region9
    $region8: #{tpu_custom_call.1} parent=1 // pred_region
      %s26 = ssub.s32 3072, 3072
      %27 = vsyncadd [#allocation6], %s26
      %s28 = sshll.u32 [#allocation5], 4
      %s29 = int_to_ptr.vmem [resolvable:$true] %s28
      %34 = dma.hbm_to_vmem [thread:$0]  %s1, 3072, %s29, [#allocation6], 192, 192, 12
    $region9: #{tpu_custom_call.1} parent=1 // pred_fallthru
      _
    // Predicated region
    $region10: #{tpu_custom_call.1} parent=1 // pred_check
      _
    $region11: #{tpu_custom_call.1} parent=1 // pred_check_branch
      %36 = sbr.rel (0) target = $region13
    $region12: #{tpu_custom_call.1} parent=1 // pred_region
      _
    $region13: #{tpu_custom_call.1} parent=1 // pred_fallthru
      _
    // Predicated region
    $region14: #{tpu_custom_call.1} parent=1 // pred_check
      _
    $region15: #{tpu_custom_call.1} parent=1 // pred_check_branch
      %38 = sbr.rel (0) target = $region17
    $region16: #{tpu_custom_call.1} parent=1 // pred_region
      %39 = dma.done [#allocation3], 128
    $region17: #{tpu_custom_call.1} parent=1 // pred_fallthru
      _
    // Predicated region
    $region18: #{tpu_custom_call.1} parent=1 // pred_check
      _
    $region19: #{tpu_custom_call.1} parent=1 // pred_check_branch
      %41 = sbr.rel (0) target = $region21
    $region20: #{tpu_custom_call.1} parent=1 // pred_region
      %42 = dma.done [#allocation6], 3072
    $region21: #{tpu_custom_call.1} parent=1 // pred_fallthru
      _
    %v44 = vld [vmem:[#allocation2] sm:$0xf]
    %v45 = vld [vmem:[#allocation2 + $0x4] sm:$0xf]
    %v46 = vld [vmem:[#allocation5] sm:$0xff]
    %v47 = vld [vmem:[#allocation5 + $0x8] sm:$0xf]
    %v48 = vld [vmem:[#allocation5 + $0xc] sm:$0xff]
    %v49 = vld [vmem:[#allocation5 + $0x14] sm:$0xf]
    %v50 = vld [vmem:[#allocation5 + $0x18] sm:$0xff]
    %v51 = vld [vmem:[#allocation5 + $0x20] sm:$0xf]
    %v52 = vld [vmem:[#allocation5 + $0x24] sm:$0xff]
    %v53 = vld [vmem:[#allocation5 + $0x2c] sm:$0xf]
    %v54 = vld [vmem:[#allocation5 + $0x30] sm:$0xff]
    %v55 = vld [vmem:[#allocation5 + $0x38] sm:$0xf]
    %v56 = vld [vmem:[#allocation5 + $0x3c] sm:$0xff]
    %v57 = vld [vmem:[#allocation5 + $0x44] sm:$0xf]
    %v58 = vld [vmem:[#allocation5 + $0x48] sm:$0xff]
    %v59 = vld [vmem:[#allocation5 + $0x50] sm:$0xf]
    %v60 = vld [vmem:[#allocation5 + $0x54] sm:$0xff]
    %v61 = vld [vmem:[#allocation5 + $0x5c] sm:$0xf]
    %v62 = vld [vmem:[#allocation5 + $0x60] sm:$0xff]
    %v63 = vld [vmem:[#allocation5 + $0x68] sm:$0xf]
    %v64 = vld [vmem:[#allocation5 + $0x6c] sm:$0xff]
    %v65 = vld [vmem:[#allocation5 + $0x74] sm:$0xf]
    %v66 = vld [vmem:[#allocation5 + $0x78] sm:$0xff]
    %v67 = vld [vmem:[#allocation5 + $0x80] sm:$0xf]
    %v68 = vld [vmem:[#allocation5 + $0x84] sm:$0xff]
    %v69 = vld [vmem:[#allocation5 + $0x8c] sm:$0xf]
    %v70 = vld [vmem:[#allocation5 + $0x90] sm:$0xff]
    %v71 = vld [vmem:[#allocation5 + $0x98] sm:$0xf]
    %v72 = vld [vmem:[#allocation5 + $0x9c] sm:$0xff]
    %v73 = vld [vmem:[#allocation5 + $0xa4] sm:$0xf]
    %v74 = vld [vmem:[#allocation5 + $0xa8] sm:$0xff]
    %v75 = vld [vmem:[#allocation5 + $0xb0] sm:$0xf]
    %v76 = vld [vmem:[#allocation5 + $0xb4] sm:$0xff]
    %v77 = vld [vmem:[#allocation5 + $0xbc] sm:$0xf]
    %v78 = vld [vmem:[%s2] sm:$0x7]
    %v80 = vlaneseq
    %v81 = vshrl.u32 %v80, 7
    %v82 = vsub.s32 0, %v81
    %v83 = vrot.slane %v78, %v82
    %v84 = vlaneseq
    %v85 = vshrl.u32 %v84, 7
    %v86 = vsub.s32 1, %v85
    %v87 = vrot.slane %v78, %v86
    %v88 = vlaneseq
    %v89 = vshrl.u32 %v88, 7
    %v90 = vsub.s32 2, %v89
    %v91 = vrot.slane %v78, %v90
    %v97 = vunpack.c.l.b16 %v44
    %v98 = vunpack.c.l.b16 %v45
    %v99 = vpack.c.b16 %v98, %v97
    %v133 = vunpack.c.l.b16 %v46
    %v134 = vunpack.c.h.b16 %v46
    %v135 = vunpack.c.l.b16 %v47
    %v136 = vunpack.c.l.b16 %v48
    %v137 = vunpack.c.h.b16 %v48
    %v138 = vunpack.c.l.b16 %v49
    %v139 = vunpack.c.l.b16 %v50
    %v140 = vunpack.c.h.b16 %v50
    %v141 = vunpack.c.l.b16 %v51
    %v142 = vunpack.c.l.b16 %v52
    %v143 = vunpack.c.h.b16 %v52
    %v144 = vunpack.c.l.b16 %v53
    %v145 = vunpack.c.l.b16 %v54
    %v146 = vunpack.c.h.b16 %v54
    %v147 = vunpack.c.l.b16 %v55
    %v148 = vunpack.c.l.b16 %v56
    %v149 = vunpack.c.h.b16 %v56
    %v150 = vunpack.c.l.b16 %v57
    %v151 = vunpack.c.l.b16 %v58
    %v152 = vunpack.c.h.b16 %v58
    %v153 = vunpack.c.l.b16 %v59
    %v154 = vunpack.c.l.b16 %v60
    %v155 = vunpack.c.h.b16 %v60
    %v156 = vunpack.c.l.b16 %v61
    %v157 = vunpack.c.l.b16 %v62
    %v158 = vunpack.c.h.b16 %v62
    %v159 = vunpack.c.l.b16 %v63
    %v160 = vunpack.c.l.b16 %v64
    %v161 = vunpack.c.h.b16 %v64
    %v162 = vunpack.c.l.b16 %v65
    %v163 = vunpack.c.l.b16 %v66
    %v164 = vunpack.c.h.b16 %v66
    %v165 = vunpack.c.l.b16 %v67
    %v166 = vunpack.c.l.b16 %v68
    %v167 = vunpack.c.h.b16 %v68
    %v168 = vunpack.c.l.b16 %v69
    %v169 = vunpack.c.l.b16 %v70
    %v170 = vunpack.c.h.b16 %v70
    %v171 = vunpack.c.l.b16 %v71
    %v172 = vunpack.c.l.b16 %v72
    %v173 = vunpack.c.h.b16 %v72
    %v174 = vunpack.c.l.b16 %v73
    %v175 = vunpack.c.l.b16 %v74
    %v176 = vunpack.c.h.b16 %v74
    %v177 = vunpack.c.l.b16 %v75
    %v178 = vunpack.c.l.b16 %v76
    %v179 = vunpack.c.h.b16 %v76
    %v180 = vunpack.c.l.b16 %v77
    %v181 = vpack.c.b16 %v136, %v133
    %v182 = vpack.c.b16 %v137, %v134
    %v183 = vpack.c.b16 %v138, %v135
    %v184 = vpack.c.b16 %v142, %v139
    %v185 = vpack.c.b16 %v143, %v140
    %v186 = vpack.c.b16 %v144, %v141
    %v187 = vpack.c.b16 %v148, %v145
    %v188 = vpack.c.b16 %v149, %v146
    %v189 = vpack.c.b16 %v150, %v147
    %v190 = vpack.c.b16 %v154, %v151
    %v191 = vpack.c.b16 %v155, %v152
    %v192 = vpack.c.b16 %v156, %v153
    %v193 = vpack.c.b16 %v160, %v157
    %v194 = vpack.c.b16 %v161, %v158
    %v195 = vpack.c.b16 %v162, %v159
    %v196 = vpack.c.b16 %v166, %v163
    %v197 = vpack.c.b16 %v167, %v164
    %v198 = vpack.c.b16 %v168, %v165
    %v199 = vpack.c.b16 %v172, %v169
    %v200 = vpack.c.b16 %v173, %v170
    %v201 = vpack.c.b16 %v174, %v171
    %v202 = vpack.c.b16 %v178, %v175
    %v203 = vpack.c.b16 %v179, %v176
    %v204 = vpack.c.b16 %v180, %v177
    %229 = vmatprep.subr.bf16.mxu0 %v203
    %230 = vmatpush1.bf16.msra.mxu0 %v202
    %231 = vmatprep.subr.bf16.mxu0 %v200
    %232 = vmatpush1.bf16.msra.mxu0 %v199
    %233 = vmatprep.subr.bf16.mxu0 %v197
    %234 = vmatpush1.bf16.msra.mxu0 %v196
    %235 = vmatprep.subr.bf16.mxu0 %v194
    %236 = vmatpush1.bf16.msra.mxu0 %v193
    %237 = vmatprep.subr.bf16.mxu0 %v191
    %238 = vmatpush1.bf16.msra.mxu0 %v190
    %239 = vmatprep.subr.bf16.mxu0 %v188
    %240 = vmatpush1.bf16.msra.mxu0 %v187
    %241 = vmatprep.subr.bf16.mxu0 %v185
    %242 = vmatpush1.bf16.msra.mxu0 %v184
    %243 = vmatprep.subr.bf16.mxu0 %v182
    %244 = vmatpush1.bf16.msra.mxu0 %v181
    %245 = vmatprep.subr.bf16.mxu0 0
    %246 = vmatpush2.bf16.msra.mxu0 0
    %247 = vmatprep.subr.bf16.mxu0 0
    %248 = vmatpush2.bf16.msra.mxu0 0
    %249 = vmatprep.subr.bf16.mxu0 0
    %250 = vmatpush2.bf16.msra.mxu0 0
    %251 = vmatprep.subr.bf16.mxu0 0
    %252 = vmatpush2.bf16.msra.mxu0 0
    %253 = vmatprep.subr.bf16.mxu0 0
    %254 = vmatpush2.bf16.msra.mxu0 0
    %255 = vmatprep.subr.bf16.mxu0 0
    %256 = vmatpush2.bf16.msra.mxu0 0
    %257 = vmatprep.subr.bf16.mxu0 0
    %258 = vmatpush2.bf16.msra.mxu0 0
    %259 = vmatprep.subr.bf16.mxu0 0
    %260 = vmatpush2.bf16.msra.mxu0 0
    %261 = vmatprep.mubr.bf16.mxu0 0
    %262 = vmatmul.mubr.bf16.gmra.mxu0 %v99
    %v263 = vpop.f32.mrf.mxu0
    %v264 = vadd.f32 %v83, %v263
    %v265 = vpop.f32.mrf.mxu0
    %v266 = vadd.f32 %v87, %v265
    %v267 = vpop.f32.mrf.mxu0
    %v268 = vadd.f32 %v83, %v267
    %v269 = vpop.f32.mrf.mxu0
    %v270 = vadd.f32 %v87, %v269
    %271 = vdwg.mxu0
    %272 = vmatprep.subr.bf16.mxu0 0
    %273 = vmatpush1.bf16.msra.mxu0 %v204
    %274 = vmatprep.subr.bf16.mxu0 0
    %275 = vmatpush1.bf16.msra.mxu0 %v201
    %276 = vmatprep.subr.bf16.mxu0 0
    %277 = vmatpush1.bf16.msra.mxu0 %v198
    %278 = vmatprep.subr.bf16.mxu0 0
    %279 = vmatpush1.bf16.msra.mxu0 %v195
    %280 = vmatprep.subr.bf16.mxu0 0
    %281 = vmatpush1.bf16.msra.mxu0 %v192
    %282 = vmatprep.subr.bf16.mxu0 0
    %283 = vmatpush1.bf16.msra.mxu0 %v189
    %284 = vmatprep.subr.bf16.mxu0 0
    %285 = vmatpush1.bf16.msra.mxu0 %v186
    %286 = vmatprep.subr.bf16.mxu0 0
    %287 = vmatpush1.bf16.msra.mxu0 %v183
    %288 = vmatprep.subr.bf16.mxu0 0
    %289 = vmatpush2.bf16.msra.mxu0 0
    %290 = vmatprep.subr.bf16.mxu0 0
    %291 = vmatpush2.bf16.msra.mxu0 0
    %292 = vmatprep.subr.bf16.mxu0 0
    %293 = vmatpush2.bf16.msra.mxu0 0
    %294 = vmatprep.subr.bf16.mxu0 0
    %295 = vmatpush2.bf16.msra.mxu0 0
    %296 = vmatprep.subr.bf16.mxu0 0
    %297 = vmatpush2.bf16.msra.mxu0 0
    %298 = vmatprep.subr.bf16.mxu0 0
    %299 = vmatpush2.bf16.msra.mxu0 0
    %300 = vmatprep.subr.bf16.mxu0 0
    %301 = vmatpush2.bf16.msra.mxu0 0
    %302 = vmatprep.subr.bf16.mxu0 0
    %303 = vmatpush2.bf16.msra.mxu0 0
    %304 = vmatprep.mubr.bf16.mxu0 0
    %305 = vmatmul.mubr.bf16.gmra.mxu0 %v99
    %v306 = vpop.f32.mrf.mxu0
    %v307 = vadd.f32 %v91, %v306
    %v308 = vpop.f32.mrf.mxu0
    %v309 = vpop.f32.mrf.mxu0
    %v310 = vadd.f32 %v91, %v309
    %v311 = vpop.f32.mrf.mxu0
    %312 = vdwg.mxu0
    %v313 = vpack.c.bf16 %v268, %v264
    %v314 = vpack.c.bf16 %v270, %v266
    %v315 = vpack.c.bf16 %v310, %v307
    %v319 = vunpack.c.l.b16 %v313
    %v320 = vunpack.c.l.b16 %v314
    %v321 = vunpack.c.l.b16 %v315
    %v322 = vunpack.c.h.b16 %v313
    %v323 = vunpack.c.h.b16 %v314
    %v324 = vunpack.c.h.b16 %v315
    %v325 = vpack.c.b16 %v320, %v319
    %v326 = vpack.c.b16 %v321, %v321
    %v327 = vpack.c.b16 %v323, %v322
    %v328 = vpack.c.b16 %v324, %v324
    %333 = vst [vmem:[#allocation7] sm:$0xff] %v325
    %334 = vst [vmem:[#allocation7 + $0x8] sm:$0xf] %v326
    %335 = vst [vmem:[#allocation7 + $0xc] sm:$0xff] %v327
    %336 = vst [vmem:[#allocation7 + $0x14] sm:$0xf] %v328
    // Predicated region
    $region22: #{tpu_custom_call.1} parent=1 // pred_check
      _
    $region23: #{tpu_custom_call.1} parent=1 // pred_check_branch
      %338 = sbr.rel (0) target = $region25
    $region24: #{tpu_custom_call.1} parent=1 // pred_region
      %s340 = ssub.s32 384, 384
      %341 = vsyncadd [#allocation4], %s340
      %s342 = sshll.u32 [#allocation7], 4
      %s343 = int_to_ptr.vmem [resolvable:$true] %s342
      %348 = dma.vmem_to_hbm [thread:$0]  %s343, 384, %s3, [#allocation4], 192, 192, 12
    $region25: #{tpu_custom_call.1} parent=1 // pred_fallthru
      _
    // Predicated region
    $region26: #{tpu_custom_call.1} parent=1 // pred_check
      _
    $region27: #{tpu_custom_call.1} parent=1 // pred_check_branch
      %350 = sbr.rel (0) target = $region29
    $region28: #{tpu_custom_call.1} parent=1 // pred_region
      %351 = dma.done [#allocation4], 384
    $region29: #{tpu_custom_call.1} parent=1 // pred_fallthru
      _
    %352 = vsyncpa [#allocation3], 1
    %353 = vsyncpa [#allocation6], 1
    %354 = vsyncpa [#allocation4], 1

</llo_original>
